<compile_context>
chip_gen: v5e
topology: v5e:2x2
jax: 0.10.0
libtpu: 0.0.40
codegen_flags: <defaults>
</compile_context>

<pallas_src>
import functools

import jax
import jax.numpy as jnp
from jax.experimental import pallas as pl
from jax.experimental.pallas import tpu as pltpu


_LANE_TILE = 512  # batch-lane tile for very large batches (multiple of 128)


def _fused_mlp_kernel(x_ref, *refs, n_layers: int, last_matvec: bool):
    """Whole MLP on one VMEM-resident batch tile, feature-major layout.

    Activations are (features, batch_tile): batch on lanes, features on
    sublanes.  Weights are PyTorch layout (Fout, Fin), biases (Fout, 1).

    refs = (w0, b0, w1, b1, ..., w_last, b_last, o_ref)
    ReLU after every layer except the last.
    """
    o_ref = refs[-1]
    p = refs[:-1]

    h = x_ref[...]                                      # (Fin, tile_b) f32
    for li in range(n_layers - 1):
        w = p[2 * li][...]                              # (Fout_l, Fin_l) bf16
        b = p[2 * li + 1][...]                          # (Fout_l, 1)    f32
        # bf16 x bf16 on the MXU, f32 accumulation; bias/ReLU stay f32.
        h = jnp.dot(w, h.astype(jnp.bfloat16),
                    preferred_element_type=jnp.float32) + b
        h = jnp.maximum(h, 0.0)

    w_last = p[-2][...]
    b_last = p[-1][...]
    if last_matvec:
        # Fout == 1: skip the 1-wide MXU pass.  w_last is pre-transposed to
        # (hidden, 1) by the wrapper; VPU multiply + sublane (XLU) reduce gives
        # the final row directly in lane-dense (1, tile_b) form -- no relayout.
        y = jnp.sum(h * w_last.astype(jnp.float32), axis=0, keepdims=True) + b_last
    else:
        y = jnp.dot(w_last, h.astype(jnp.bfloat16),
                    preferred_element_type=jnp.float32) + b_last

    o_ref[...] = y.astype(o_ref.dtype)                  # lane-dense store


def _batch_tile(B: int) -> int:
    """Fixed, alignment-friendly batch (lane) tile."""
    if B <= 128:
        return B            # one block; lane dim == full array dim (always legal)
    if B <= 1024:
        return 128          # >=2 grid steps: keeps pipeline busy, feeds both v7x TCs
    return _LANE_TILE       # large batches: bigger tiles amortize per-step overhead


def fused_mlp_forward(x, params):
    """x: (B, Fin) f32. params: ((w: (Fout, Fin) bf16, b: (Fout, 1) f32), ...)."""
    B, Fin = x.shape
    n_layers = len(params)
    Fout = params[-1][0].shape[0]
    last_matvec = (Fout == 1)

    # Lane-dense layout: batch on lanes.  The transpose here is wrapper-side
    # layout plumbing; inside the kernel everything is a canonical dot /
    # broadcast and the output store is unmasked.
    x_t = x.T                                           # (Fin, B)

    tile_b = _batch_tile(B)
    grid = (pl.cdiv(B, tile_b),)    # ragged last block handled by Pallas masking

    # Grid-invariant params: single-buffered (no wasted second VMEM buffer).
    def _resident(shape):
        return pl.BlockSpec(shape, lambda i: (0, 0), pipeline_mode=pl.Buffered(1))

    flat_params = []
    in_specs = [pl.BlockSpec((Fin, tile_b), lambda i: (0, i))]
    for li, (w, b) in enumerate(params):
        if last_matvec and li == n_layers - 1:
            w = w.T                                     # (hidden, 1) for the VPU path
        flat_params.extend((w, b))
        in_specs.append(_resident(w.shape))
        in_specs.append(_resident(b.shape))

    kernel = functools.partial(_fused_mlp_kernel, n_layers=n_layers,
                               last_matvec=last_matvec)
    out_t = pl.pallas_call(
        kernel,
        out_shape=jax.ShapeDtypeStruct((Fout, B), jnp.float32),
        grid_spec=pltpu.PrefetchScalarGridSpec(
            num_scalar_prefetch=0,
            grid=grid,
            in_specs=in_specs,
            out_specs=pl.BlockSpec((Fout, tile_b), lambda i: (0, i)),
        ),
        compiler_params=pltpu.CompilerParams(
            dimension_semantics=("parallel",),          # batch tiles independent
            vmem_limit_bytes=32 * 1024 * 1024,          # > v5e's 16 MiB scoped default
        ),
    )(x_t, *flat_params)
    return out_t.T                                      # (B, Fout)


def init_linear_params(key, in_features, out_features):
    """torch.nn.Linear-style init (uniform +-1/sqrt(fan_in)).
    Weight kept in PyTorch layout (out_features, in_features), stored bf16 for
    the MXU; bias stored f32 as a (out_features, 1) column for lane broadcast."""
    kw, kb = jax.random.split(key)
    bound = 1.0 / jnp.sqrt(jnp.float32(in_features))
    w = jax.random.uniform(kw, (out_features, in_features), jnp.float32,
                           minval=-bound, maxval=bound).astype(jnp.bfloat16)
    b = jax.random.uniform(kb, (out_features, 1), jnp.float32,
                           minval=-bound, maxval=bound)
    return w, b


class FullyConnectedPallas:
    def __init__(self, input_size, output_size, hidden_size, n_hidden_layers, key):
        sizes = [(input_size, hidden_size)]
        for _ in range(n_hidden_layers):
            sizes.append((hidden_size, hidden_size))
        sizes.append((hidden_size, output_size))
        keys = jax.random.split(key, len(sizes))
        params = []
        for (fin, fout), k in zip(sizes, keys):
            params.append(init_linear_params(k, fin, fout))
        self.params = tuple(params)
        # Single jit-compiled executable wrapping the one fused pallas_call.
        self._fwd = jax.jit(fused_mlp_forward)

    def __call__(self, x):
        return self._fwd(x, self.params)

    def reference(self, x):
        # Pure-JAX reference mirroring the kernel's numerics (bf16 MXU inputs,
        # f32 accumulation, f32 bias/ReLU, VPU path for the Fout=1 last layer).
        h = x.T.astype(jnp.float32)
        n = len(self.params)
        for w, b in self.params[:-1]:
            h = jnp.dot(w, h.astype(jnp.bfloat16),
                        preferred_element_type=jnp.float32) + b
            h = jnp.maximum(h, 0.0)
        w, b = self.params[-1]
        if w.shape[0] == 1:
            y = jnp.sum(h * w.astype(jnp.float32).T, axis=0, keepdims=True) + b
        else:
            y = jnp.dot(w, h.astype(jnp.bfloat16),
                        preferred_element_type=jnp.float32) + b
        assert n >= 1
        return y.T


if __name__ == "__main__":
    key = jax.random.PRNGKey(0)
    k_in, k_params = jax.random.split(key)

    # Matches the script's `x = torch.rand(20, 5)` usage pattern.
    batch, input_size, hidden_size, output_size, n_hidden = 20, 5, 32, 1, 2
    x = jax.random.uniform(k_in, (batch, input_size), jnp.float32)

    model = FullyConnectedPallas(input_size, output_size, hidden_size, n_hidden,
                                 key=k_params)

    out = model(x)
    out = jax.block_until_ready(out)

    ref = model.reference(x)
    assert out.shape == (batch, output_size)
    assert jnp.allclose(out, ref, atol=1e-4, rtol=1e-4)

    print("KERNEL_OK")
</pallas_src>

<mosaic_0001>
module attributes {stable_mosaic.version = 11 : i64} {
  func.func @_fused_mlp_kernel(%arg0: i32, %arg1: memref<5x20xf32, #tpu.memory_space<vmem>>, %arg2: memref<32x5xbf16, #tpu.memory_space<vmem>>, %arg3: memref<32x1xf32, #tpu.memory_space<vmem>>, %arg4: memref<32x32xbf16, #tpu.memory_space<vmem>>, %arg5: memref<32x1xf32, #tpu.memory_space<vmem>>, %arg6: memref<32x32xbf16, #tpu.memory_space<vmem>>, %arg7: memref<32x1xf32, #tpu.memory_space<vmem>>, %arg8: memref<32x1xbf16, #tpu.memory_space<vmem>>, %arg9: memref<1x1xf32, #tpu.memory_space<vmem>>, %arg10: memref<1x20xf32, #tpu.memory_space<vmem>>) attributes {dimension_semantics = [#tpu.dimension_semantics<parallel>], iteration_bounds = array<i64: 1>, scalar_prefetch = 0 : i64, scratch_operands = 0 : i64, tpu.core_type = #tpu.core_type<tc>, window_params = [{transform_indices = @transform_0, window_bounds = array<i64: 5, 20>}, {pipeline_mode = #tpu.pipeline_mode<synchronous>, transform_indices = @transform_1, window_bounds = array<i64: 32, 5>}, {pipeline_mode = #tpu.pipeline_mode<synchronous>, transform_indices = @transform_2, window_bounds = array<i64: 32, 1>}, {pipeline_mode = #tpu.pipeline_mode<synchronous>, transform_indices = @transform_3, window_bounds = array<i64: 32, 32>}, {pipeline_mode = #tpu.pipeline_mode<synchronous>, transform_indices = @transform_4, window_bounds = array<i64: 32, 1>}, {pipeline_mode = #tpu.pipeline_mode<synchronous>, transform_indices = @transform_5, window_bounds = array<i64: 32, 32>}, {pipeline_mode = #tpu.pipeline_mode<synchronous>, transform_indices = @transform_6, window_bounds = array<i64: 32, 1>}, {pipeline_mode = #tpu.pipeline_mode<synchronous>, transform_indices = @transform_7, window_bounds = array<i64: 32, 1>}, {pipeline_mode = #tpu.pipeline_mode<synchronous>, transform_indices = @transform_8, window_bounds = array<i64: 1, 1>}, {transform_indices = @transform_9, window_bounds = array<i64: 1, 20>}]} {
    %c0 = arith.constant 0 : index
    %c0_0 = arith.constant 0 : index
    %0 = vector.load %arg1[%c0, %c0_0] : memref<5x20xf32, #tpu.memory_space<vmem>>, vector<5x20xf32>
    %c0_1 = arith.constant 0 : index
    %c0_2 = arith.constant 0 : index
    %1 = vector.load %arg2[%c0_1, %c0_2] : memref<32x5xbf16, #tpu.memory_space<vmem>>, vector<32x5xbf16>
    %c0_3 = arith.constant 0 : index
    %c0_4 = arith.constant 0 : index
    %2 = vector.load %arg3[%c0_3, %c0_4] : memref<32x1xf32, #tpu.memory_space<vmem>>, vector<32x1xf32>
    %3 = arith.truncf %0 : vector<5x20xf32> to vector<5x20xbf16>
    %cst = arith.constant dense<0.000000e+00> : vector<32x20xf32>
    %4 = tpu.matmul %1, %3, %cst {dimension_numbers = #tpu.dot_dimension_numbers<[1], [0], [0], [1], [0, 0, 1, 1], [], []>} : vector<32x5xbf16>, vector<5x20xbf16>, vector<32x20xf32> -> vector<32x20xf32>
    %5 = vector.broadcast %2 : vector<32x1xf32> to vector<32x20xf32>
    %6 = arith.addf %4, %5 : vector<32x20xf32>
    %cst_5 = arith.constant 0.000000e+00 : f32
    %7 = vector.broadcast %cst_5 : f32 to vector<32x20xf32>
    %8 = arith.maximumf %6, %7 : vector<32x20xf32>
    %c0_6 = arith.constant 0 : index
    %c0_7 = arith.constant 0 : index
    %9 = vector.load %arg4[%c0_6, %c0_7] : memref<32x32xbf16, #tpu.memory_space<vmem>>, vector<32x32xbf16>
    %c0_8 = arith.constant 0 : index
    %c0_9 = arith.constant 0 : index
    %10 = vector.load %arg5[%c0_8, %c0_9] : memref<32x1xf32, #tpu.memory_space<vmem>>, vector<32x1xf32>
    %11 = arith.truncf %8 : vector<32x20xf32> to vector<32x20xbf16>
    %cst_10 = arith.constant dense<0.000000e+00> : vector<32x20xf32>
    %12 = tpu.matmul %9, %11, %cst_10 {dimension_numbers = #tpu.dot_dimension_numbers<[1], [0], [0], [1], [0, 0, 1, 1], [], []>} : vector<32x32xbf16>, vector<32x20xbf16>, vector<32x20xf32> -> vector<32x20xf32>
    %13 = vector.broadcast %10 : vector<32x1xf32> to vector<32x20xf32>
    %14 = arith.addf %12, %13 : vector<32x20xf32>
    %cst_11 = arith.constant 0.000000e+00 : f32
    %15 = vector.broadcast %cst_11 : f32 to vector<32x20xf32>
    %16 = arith.maximumf %14, %15 : vector<32x20xf32>
    %c0_12 = arith.constant 0 : index
    %c0_13 = arith.constant 0 : index
    %17 = vector.load %arg6[%c0_12, %c0_13] : memref<32x32xbf16, #tpu.memory_space<vmem>>, vector<32x32xbf16>
    %c0_14 = arith.constant 0 : index
    %c0_15 = arith.constant 0 : index
    %18 = vector.load %arg7[%c0_14, %c0_15] : memref<32x1xf32, #tpu.memory_space<vmem>>, vector<32x1xf32>
    %19 = arith.truncf %16 : vector<32x20xf32> to vector<32x20xbf16>
    %cst_16 = arith.constant dense<0.000000e+00> : vector<32x20xf32>
    %20 = tpu.matmul %17, %19, %cst_16 {dimension_numbers = #tpu.dot_dimension_numbers<[1], [0], [0], [1], [0, 0, 1, 1], [], []>} : vector<32x32xbf16>, vector<32x20xbf16>, vector<32x20xf32> -> vector<32x20xf32>
    %21 = vector.broadcast %18 : vector<32x1xf32> to vector<32x20xf32>
    %22 = arith.addf %20, %21 : vector<32x20xf32>
    %cst_17 = arith.constant 0.000000e+00 : f32
    %23 = vector.broadcast %cst_17 : f32 to vector<32x20xf32>
    %24 = arith.maximumf %22, %23 : vector<32x20xf32>
    %c0_18 = arith.constant 0 : index
    %c0_19 = arith.constant 0 : index
    %25 = vector.load %arg8[%c0_18, %c0_19] : memref<32x1xbf16, #tpu.memory_space<vmem>>, vector<32x1xbf16>
    %c0_20 = arith.constant 0 : index
    %c0_21 = arith.constant 0 : index
    %26 = vector.load %arg9[%c0_20, %c0_21] : memref<1x1xf32, #tpu.memory_space<vmem>>, vector<1x1xf32>
    %27 = arith.extf %25 : vector<32x1xbf16> to vector<32x1xf32>
    %28 = vector.broadcast %27 : vector<32x1xf32> to vector<32x20xf32>
    %29 = arith.mulf %24, %28 : vector<32x20xf32>
    %cst_22 = arith.constant dense<0.000000e+00> : vector<20xf32>
    %30 = vector.multi_reduction <add>, %29, %cst_22 [0] : vector<32x20xf32> to vector<20xf32>
    %31 = vector.shape_cast %30 : vector<20xf32> to vector<1x20xf32>
    %32 = vector.broadcast %26 : vector<1x1xf32> to vector<1x20xf32>
    %33 = arith.addf %31, %32 : vector<1x20xf32>
    %c0_23 = arith.constant 0 : index
    %c0_24 = arith.constant 0 : index
    %34 = vector.load %arg10[%c0_23, %c0_24] : memref<1x20xf32, #tpu.memory_space<vmem>>, vector<1x20xf32>
    tpu.vector_store %arg10[%c0_23, %c0_24], %33 {strides = array<i32>} : memref<1x20xf32, #tpu.memory_space<vmem>>, vector<1x20xf32>,
    return
  }
  func.func @transform_0(%arg0: i32) -> (i32, i32) {
    %c0_i32 = arith.constant 0 : i32
    %c0_i32_0 = arith.constant 0 : i32
    return %c0_i32, %arg0 : i32, i32
  }
  func.func @transform_1(%arg0: i32) -> (i32, i32) {
    %c0_i32 = arith.constant 0 : i32
    %c0_i32_0 = arith.constant 0 : i32
    %c0_i32_1 = arith.constant 0 : i32
    return %c0_i32, %c0_i32_0 : i32, i32
  }
  func.func @transform_2(%arg0: i32) -> (i32, i32) {
    %c0_i32 = arith.constant 0 : i32
    %c0_i32_0 = arith.constant 0 : i32
    %c0_i32_1 = arith.constant 0 : i32
    return %c0_i32, %c0_i32_0 : i32, i32
  }
  func.func @transform_3(%arg0: i32) -> (i32, i32) {
    %c0_i32 = arith.constant 0 : i32
    %c0_i32_0 = arith.constant 0 : i32
    %c0_i32_1 = arith.constant 0 : i32
    return %c0_i32, %c0_i32_0 : i32, i32
  }
  func.func @transform_4(%arg0: i32) -> (i32, i32) {
    %c0_i32 = arith.constant 0 : i32
    %c0_i32_0 = arith.constant 0 : i32
    %c0_i32_1 = arith.constant 0 : i32
    return %c0_i32, %c0_i32_0 : i32, i32
  }
  func.func @transform_5(%arg0: i32) -> (i32, i32) {
    %c0_i32 = arith.constant 0 : i32
    %c0_i32_0 = arith.constant 0 : i32
    %c0_i32_1 = arith.constant 0 : i32
    return %c0_i32, %c0_i32_0 : i32, i32
  }
  func.func @transform_6(%arg0: i32) -> (i32, i32) {
    %c0_i32 = arith.constant 0 : i32
    %c0_i32_0 = arith.constant 0 : i32
    %c0_i32_1 = arith.constant 0 : i32
    return %c0_i32, %c0_i32_0 : i32, i32
  }
  func.func @transform_7(%arg0: i32) -> (i32, i32) {
    %c0_i32 = arith.constant 0 : i32
    %c0_i32_0 = arith.constant 0 : i32
    %c0_i32_1 = arith.constant 0 : i32
    return %c0_i32, %c0_i32_0 : i32, i32
  }
  func.func @transform_8(%arg0: i32) -> (i32, i32) {
    %c0_i32 = arith.constant 0 : i32
    %c0_i32_0 = arith.constant 0 : i32
    %c0_i32_1 = arith.constant 0 : i32
    return %c0_i32, %c0_i32_0 : i32, i32
  }
  func.func @transform_9(%arg0: i32) -> (i32, i32) {
    %c0_i32 = arith.constant 0 : i32
    %c0_i32_0 = arith.constant 0 : i32
    return %c0_i32, %arg0 : i32, i32
  }
}

</mosaic_0001>

<llo_original>
// kernel: fused_mlp_forward.1
$region0: #{fused_mlp_forward.1}
  #allocation0 [shape = 'u32[]', space=smem, size = 0x4, offset = 0x4, fixed_abs, tag = 'smem constant byte address 0x4 - core index']
  #allocation1 [shape = 'u32[72,128]{1,0:T(1,128)}', space=vmem, size = 0x9000, scoped, tag = 'internal scratch']
  #allocation2 [shape = 'f32[1,1]{1,0:T(1,128)S(1)}', space=vmem, size = 0x200, scoped, tag = 'scoped memory for fused_mlp_forward.1']
  %s0 = inlined_call_operand.vmem [shape: f32[5,20], index: 0, kind: input, shape index: {}]
  %s1 = inlined_call_operand.vmem [shape: bf16[32,5], index: 1, kind: input, shape index: {}]
  %s2 = inlined_call_operand.vmem [shape: f32[32,1], index: 2, kind: input, shape index: {}]
  %s3 = inlined_call_operand.vmem [shape: bf16[32,32], index: 3, kind: input, shape index: {}]
  %s4 = inlined_call_operand.vmem [shape: f32[32,1], index: 4, kind: input, shape index: {}]
  %s5 = inlined_call_operand.vmem [shape: bf16[32,32], index: 5, kind: input, shape index: {}]
  %s6 = inlined_call_operand.vmem [shape: f32[32,1], index: 6, kind: input, shape index: {}]
  %s7 = inlined_call_operand.vmem [shape: bf16[32,1], index: 7, kind: input, shape index: {}]
  %s8 = inlined_call_operand.<no memory space> [shape: f32[1,1], index: 8, kind: input, shape index: {}]
  %s9 = inlined_call_operand.hbm [shape: f32[1,20], index: 9, kind: output, shape index: {}]
  %s10 = sld [smem:[#allocation0]]
  $region46: #{fused_mlp_forward.1} parent=0
    _
  %s12 = ssub.s32 1, %s10
  %s13 = scalar_select 0, %s12, %s10
  %v14 = vstv %s8
  %15 = vst [vmem:[#allocation2] sm:$0x1] %v14
  $region1: #{fused_mlp_forward.1} parent=0
    #allocation3 [shape = 'u8[512]{0}', space=vmem, size = 0x400, scoped, tag = 'output window, operand 0, single buffered']
    #allocation4 [shape = 's32[1]{0}', space=sflag, size = 0x4, scoped, tag = 'scoped memory for fused_mlp_forward.1']
    %16 = vsyncpa [#allocation4], 0
    // Predicated region
    $region2: #{fused_mlp_forward.1} parent=1 // pred_check
      _
    $region3: #{fused_mlp_forward.1} parent=1 // pred_check_branch
      %18 = sbr.rel (0) target = $region5
    $region4: #{fused_mlp_forward.1} parent=1 // pred_region
      _
    $region5: #{fused_mlp_forward.1} parent=1 // pred_fallthru
      _
    // Predicated region
    $region6: #{fused_mlp_forward.1} parent=1 // pred_check
      _
    $region7: #{fused_mlp_forward.1} parent=1 // pred_check_branch
      %20 = sbr.rel (0) target = $region9
    $region8: #{fused_mlp_forward.1} parent=1 // pred_region
      _
    $region9: #{fused_mlp_forward.1} parent=1 // pred_fallthru
      _
    // Predicated region
    $region10: #{fused_mlp_forward.1} parent=1 // pred_check
      _
    $region11: #{fused_mlp_forward.1} parent=1 // pred_check_branch
      %22 = sbr.rel (0) target = $region13
    $region12: #{fused_mlp_forward.1} parent=1 // pred_region
      _
    $region13: #{fused_mlp_forward.1} parent=1 // pred_fallthru
      _
    // Predicated region
    $region14: #{fused_mlp_forward.1} parent=1 // pred_check
      _
    $region15: #{fused_mlp_forward.1} parent=1 // pred_check_branch
      %24 = sbr.rel (0) target = $region17
    $region16: #{fused_mlp_forward.1} parent=1 // pred_region
      _
    $region17: #{fused_mlp_forward.1} parent=1 // pred_fallthru
      _
    // Predicated region
    $region18: #{fused_mlp_forward.1} parent=1 // pred_check
      _
    $region19: #{fused_mlp_forward.1} parent=1 // pred_check_branch
      %26 = sbr.rel (0) target = $region21
    $region20: #{fused_mlp_forward.1} parent=1 // pred_region
      _
    $region21: #{fused_mlp_forward.1} parent=1 // pred_fallthru
      _
    // Predicated region
    $region22: #{fused_mlp_forward.1} parent=1 // pred_check
      _
    $region23: #{fused_mlp_forward.1} parent=1 // pred_check_branch
      %28 = sbr.rel (0) target = $region25
    $region24: #{fused_mlp_forward.1} parent=1 // pred_region
      _
    $region25: #{fused_mlp_forward.1} parent=1 // pred_fallthru
      _
    // Predicated region
    $region26: #{fused_mlp_forward.1} parent=1 // pred_check
      _
    $region27: #{fused_mlp_forward.1} parent=1 // pred_check_branch
      %30 = sbr.rel (0) target = $region29
    $region28: #{fused_mlp_forward.1} parent=1 // pred_region
      _
    $region29: #{fused_mlp_forward.1} parent=1 // pred_fallthru
      _
    // Predicated region
    $region30: #{fused_mlp_forward.1} parent=1 // pred_check
      _
    $region31: #{fused_mlp_forward.1} parent=1 // pred_check_branch
      %32 = sbr.rel (0) target = $region33
    $region32: #{fused_mlp_forward.1} parent=1 // pred_region
      _
    $region33: #{fused_mlp_forward.1} parent=1 // pred_fallthru
      _
    // Predicated region
    $region34: #{fused_mlp_forward.1} parent=1 // pred_check
      _
    $region35: #{fused_mlp_forward.1} parent=1 // pred_check_branch
      %34 = sbr.rel (0) target = $region37
    $region36: #{fused_mlp_forward.1} parent=1 // pred_region
      _
    $region37: #{fused_mlp_forward.1} parent=1 // pred_fallthru
      _
    %v36 = vld [vmem:[%s0] sm:$0x1f]
    %v37 = vld [vmem:[%s1] sm:$0xf]
    %v38 = vld [vmem:[%s1 + $0x4] sm:$0xf]
    %v39 = vld [vmem:[%s1 + $0x8] sm:$0xf]
    %v40 = vld [vmem:[%s1 + $0xc] sm:$0xf]
    %v41 = vld [vmem:[%s2] sm:$0xff]
    %v42 = vld [vmem:[%s2 + $0x8] sm:$0xff]
    %v43 = vld [vmem:[%s2 + $0x10] sm:$0xff]
    %v44 = vld [vmem:[%s2 + $0x18] sm:$0xff]
    %v45 = vpack.c.bf16 %v36, %v36
    %47 = vset.pattern.permute.xlu0 0
    %48 = vperm.xlu0 %47, %v41
    %v49 = vpop.permute.xlu0 %48
    %52 = vset.pattern.permute.xlu0 0
    %53 = vperm.xlu0 %52, %v42
    %v54 = vpop.permute.xlu0 %53
    %57 = vset.pattern.permute.xlu0 0
    %58 = vperm.xlu0 %57, %v43
    %v59 = vpop.permute.xlu0 %58
    %62 = vset.pattern.permute.xlu0 0
    %63 = vperm.xlu0 %62, %v44
    %v64 = vpop.permute.xlu0 %63
    %v70 = vunpack.c.l.b16 %v37
    %v71 = vunpack.c.l.b16 %v38
    %v72 = vunpack.c.l.b16 %v39
    %v73 = vunpack.c.l.b16 %v40
    %v74 = vpack.c.b16 %v71, %v70
    %v75 = vpack.c.b16 %v73, %v72
    %vm76 = vcmask 39936
    %v78 = vsel %vm76, %v74, 0
    %v81 = vsel %vm76, %v75, 0
    %vm83 = vcmask 1041408
    %vm84 = vcmask 1042432
    %v85 = vsel %vm83, 4294967295, 65535
    %v86 = vsel %vm84, %v85, 0
    %v88 = vand.u32 %v45, %v86
    %90 = vmatpush.bf16.msra.mxu0 0
    %91 = vmatpush.bf16.msra.mxu0 0
    %92 = vmatpush.bf16.msra.mxu0 0
    %93 = vmatpush.bf16.msra.mxu0 0
    %94 = vmatpush.bf16.msra.mxu0 0
    %95 = vmatpush.bf16.msra.mxu0 0
    %96 = vmatpush.bf16.msra.mxu0 0
    %97 = vmatpush.bf16.msra.mxu0 %v88
    %98 = vmatmul.bf16.gmra.mxu0 %v78
    %v99 = vpop.f32.mrf.mxu0
    %v100 = vadd.f32 %v49, %v99
    %v101 = vpop.f32.mrf.mxu0
    %v102 = vadd.f32 %v54, %v101
    %103 = vmatmul.bf16.gmra.mxu0 %v81
    %v104 = vpop.f32.mrf.mxu0
    %v105 = vadd.f32 %v59, %v104
    %v106 = vpop.f32.mrf.mxu0
    %v107 = vadd.f32 %v64, %v106
    %108 = vdwg.mxu0
    %v109 = vmax.f32 %v100, 0.0
    %v110 = vmax.f32 %v102, 0.0
    %v111 = vmax.f32 %v105, 0.0
    %v112 = vmax.f32 %v107, 0.0
    %v113 = vld [vmem:[%s3] sm:$0xf]
    %v114 = vld [vmem:[%s3 + $0x4] sm:$0xf]
    %v115 = vld [vmem:[%s3 + $0x8] sm:$0xf]
    %v116 = vld [vmem:[%s3 + $0xc] sm:$0xf]
    %v117 = vld [vmem:[%s4] sm:$0xff]
    %v118 = vld [vmem:[%s4 + $0x8] sm:$0xff]
    %v119 = vld [vmem:[%s4 + $0x10] sm:$0xff]
    %v120 = vld [vmem:[%s4 + $0x18] sm:$0xff]
    %v121 = vpack.c.bf16 %v110, %v109
    %v122 = vpack.c.bf16 %v112, %v111
    %124 = vset.pattern.permute.xlu0 0
    %125 = vperm.xlu0 %124, %v117
    %v126 = vpop.permute.xlu0 %125
    %129 = vset.pattern.permute.xlu0 0
    %130 = vperm.xlu0 %129, %v118
    %v131 = vpop.permute.xlu0 %130
    %134 = vset.pattern.permute.xlu0 0
    %135 = vperm.xlu0 %134, %v119
    %v136 = vpop.permute.xlu0 %135
    %139 = vset.pattern.permute.xlu0 0
    %140 = vperm.xlu0 %139, %v120
    %v141 = vpop.permute.xlu0 %140
    %v147 = vunpack.c.l.b16 %v113
    %v148 = vunpack.c.l.b16 %v114
    %v149 = vunpack.c.l.b16 %v115
    %v150 = vunpack.c.l.b16 %v116
    %v151 = vpack.c.b16 %v148, %v147
    %v152 = vpack.c.b16 %v150, %v149
    %vm153 = vcmask 261120
    %v155 = vsel %vm153, %v151, 0
    %v158 = vsel %vm153, %v152, 0
    %160 = vmatpush.bf16.msra.mxu0 0
    %161 = vmatpush.bf16.msra.mxu0 0
    %162 = vmatpush.bf16.msra.mxu0 0
    %163 = vmatpush.bf16.msra.mxu0 0
    %164 = vmatpush.bf16.msra.mxu0 0
    %165 = vmatpush.bf16.msra.mxu0 0
    %166 = vmatpush.bf16.msra.mxu0 %v122
    %167 = vmatpush.bf16.msra.mxu0 %v121
    %168 = vmatmul.bf16.gmra.mxu0 %v155
    %v169 = vpop.f32.mrf.mxu0
    %v170 = vadd.f32 %v126, %v169
    %v171 = vpop.f32.mrf.mxu0
    %v172 = vadd.f32 %v131, %v171
    %173 = vmatmul.bf16.gmra.mxu0 %v158
    %v174 = vpop.f32.mrf.mxu0
    %v175 = vadd.f32 %v136, %v174
    %v176 = vpop.f32.mrf.mxu0
    %v177 = vadd.f32 %v141, %v176
    %178 = vdwg.mxu0
    %v179 = vmax.f32 %v170, 0.0
    %v180 = vmax.f32 %v172, 0.0
    %v181 = vmax.f32 %v175, 0.0
    %v182 = vmax.f32 %v177, 0.0
    %v183 = vld [vmem:[%s5] sm:$0xf]
    %v184 = vld [vmem:[%s5 + $0x4] sm:$0xf]
    %v185 = vld [vmem:[%s5 + $0x8] sm:$0xf]
    %v186 = vld [vmem:[%s5 + $0xc] sm:$0xf]
    %v187 = vld [vmem:[%s6] sm:$0xff]
    %v188 = vld [vmem:[%s6 + $0x8] sm:$0xff]
    %v189 = vld [vmem:[%s6 + $0x10] sm:$0xff]
    %v190 = vld [vmem:[%s6 + $0x18] sm:$0xff]
    %v191 = vpack.c.bf16 %v180, %v179
    %v192 = vpack.c.bf16 %v182, %v181
    %194 = vset.pattern.permute.xlu0 0
    %195 = vperm.xlu0 %194, %v187
    %v196 = vpop.permute.xlu0 %195
    %199 = vset.pattern.permute.xlu0 0
    %200 = vperm.xlu0 %199, %v188
    %v201 = vpop.permute.xlu0 %200
    %204 = vset.pattern.permute.xlu0 0
    %205 = vperm.xlu0 %204, %v189
    %v206 = vpop.permute.xlu0 %205
    %209 = vset.pattern.permute.xlu0 0
    %210 = vperm.xlu0 %209, %v190
    %v211 = vpop.permute.xlu0 %210
    %v217 = vunpack.c.l.b16 %v183
    %v218 = vunpack.c.l.b16 %v184
    %v219 = vunpack.c.l.b16 %v185
    %v220 = vunpack.c.l.b16 %v186
    %v221 = vpack.c.b16 %v218, %v217
    %v222 = vpack.c.b16 %v220, %v219
    %v224 = vsel %vm153, %v221, 0
    %v227 = vsel %vm153, %v222, 0
    %229 = vmatpush.bf16.msra.mxu0 0
    %230 = vmatpush.bf16.msra.mxu0 0
    %231 = vmatpush.bf16.msra.mxu0 0
    %232 = vmatpush.bf16.msra.mxu0 0
    %233 = vmatpush.bf16.msra.mxu0 0
    %234 = vmatpush.bf16.msra.mxu0 0
    %235 = vmatpush.bf16.msra.mxu0 %v192
    %236 = vmatpush.bf16.msra.mxu0 %v191
    %237 = vmatmul.bf16.gmra.mxu0 %v224
    %v238 = vpop.f32.mrf.mxu0
    %v239 = vadd.f32 %v196, %v238
    %v240 = vpop.f32.mrf.mxu0
    %v241 = vadd.f32 %v201, %v240
    %242 = vmatmul.bf16.gmra.mxu0 %v227
    %v243 = vpop.f32.mrf.mxu0
    %v244 = vadd.f32 %v206, %v243
    %v245 = vpop.f32.mrf.mxu0
    %v246 = vadd.f32 %v211, %v245
    %247 = vdwg.mxu0
    %v248 = vmax.f32 %v239, 0.0
    %v249 = vmax.f32 %v241, 0.0
    %v250 = vmax.f32 %v244, 0.0
    %v251 = vmax.f32 %v246, 0.0
    %v252 = vld [vmem:[%s7] sm:$0xf]
    %v253 = vld [vmem:[%s7 + $0x4] sm:$0xf]
    %v254 = vld [vmem:[%s7 + $0x8] sm:$0xf]
    %v255 = vld [vmem:[%s7 + $0xc] sm:$0xf]
    %v256 = vld [vmem:[#allocation2] sm:$0x1]
    %v257 = vunpack.c.l.bf16 %v252
    %v258 = vunpack.c.l.bf16 %v253
    %v259 = vunpack.c.l.bf16 %v254
    %v260 = vunpack.c.l.bf16 %v255
    %262 = vset.pattern.permute.xlu0 0
    %263 = vperm.xlu0 %262, %v257
    %v264 = vpop.permute.xlu0 %263
    %267 = vset.pattern.permute.xlu0 0
    %268 = vperm.xlu0 %267, %v258
    %v269 = vpop.permute.xlu0 %268
    %272 = vset.pattern.permute.xlu0 0
    %273 = vperm.xlu0 %272, %v259
    %v274 = vpop.permute.xlu0 %273
    %277 = vset.pattern.permute.xlu0 0
    %278 = vperm.xlu0 %277, %v260
    %v279 = vpop.permute.xlu0 %278
    %v281 = vmul.f32 %v248, %v264
    %v282 = vmul.f32 %v249, %v269
    %v283 = vmul.f32 %v250, %v274
    %v284 = vmul.f32 %v251, %v279
    %vm285 = vcmask 162816
    %v286 = vsel %vm285, %v281, 0.0
    %v287 = vsel %vm285, %v282, 0.0
    %v288 = vadd.f32 %v286, %v287
    %v289 = vsel %vm285, %v283, 0.0
    %v290 = vadd.f32 %v288, %v289
    %v291 = vsel %vm285, %v284, 0.0
    %v292 = vadd.f32 %v290, %v291
    %v293 = vrot.slane %v292, 4
    %v294 = vadd.f32 %v292, %v293
    %v295 = vrot.slane %v294, 2
    %v296 = vadd.f32 %v294, %v295
    %v297 = vrot.slane %v296, 1
    %v298 = vadd.f32 %v296, %v297
    %300 = vset.pattern.permute.xlu0 0
    %301 = vperm.xlu0 %300, %v256
    %v302 = vpop.permute.xlu0 %301
    %v304 = vperm.slane %v302, 0
    %v305 = vadd.f32 %v298, %v304
    %vm306 = vcmask 155648
    %307 = vst.msk [vmem:[#allocation3] sm:$0x1] %vm306, %v305
    // Predicated region
    $region38: #{fused_mlp_forward.1} parent=1 // pred_check
      _
    $region39: #{fused_mlp_forward.1} parent=1 // pred_check_branch
      %309 = sbr.rel (0) target = $region41
    $region40: #{fused_mlp_forward.1} parent=1 // pred_region
      %311 = vsyncadd [#allocation4], 0
      %s313 = sshll.u32 [#allocation3], 4
      %s314 = int_to_ptr.vmem [resolvable:$true] %s313
      %s315 = sshll.u32 %s9, 4
      %s316 = int_to_ptr.hbm [resolvable:$true] %s315
      %318 = dma.vmem_to_hbm [thread:$0]  %s314, 16, %s316, [#allocation4]
    $region41: #{fused_mlp_forward.1} parent=1 // pred_fallthru
      _
    // Predicated region
    $region42: #{fused_mlp_forward.1} parent=1 // pred_check
      _
    $region43: #{fused_mlp_forward.1} parent=1 // pred_check_branch
      %320 = sbr.rel (0) target = $region45
    $region44: #{fused_mlp_forward.1} parent=1 // pred_region
      %322 = dma.done [#allocation4], 16
    $region45: #{fused_mlp_forward.1} parent=1 // pred_fallthru
      _
    %323 = vsyncpa [#allocation4], 1

</llo_original>
